<compile_context>
chip_gen: v6e
topology: v6e:2x2x1
jax: 0.10.0
libtpu: 0.0.40
codegen_flags: <defaults>
</compile_context>

<pallas_src>
import math

import jax
import jax.numpy as jnp
from jax.experimental import pallas as pl
from jax.experimental.pallas import tpu as pltpu


def vk_diffusion_kernel(x_ref, n_ref, coef_ref, w1_ref, e1_ref, w2_ref,
                        out_ref):
    """One grid step processes a (Bb, Tt, C) chunk of the batch/time plane."""
    Bb, Tt, C = x_ref.shape
    H = w1_ref.shape[1]

    x = x_ref[...]                         # (Bb, Tt, C) f32
    noise = n_ref[...]                     # (Bb, Tt, C) f32

    coef = coef_ref[...]                   # (Bb, 1, 8) f32, packed per-batch
    sig = coef[:, :, 0:1]                  # sigma
    c_skip = coef[:, :, 1:2]
    c_in = coef[:, :, 2:3]
    inv_c_out = coef[:, :, 3:4]            # 1 / (c_out + 1e-7)
    t = coef[:, :, 4:5]                    # atan(sigma) * 2 / pi

    # forward(): x_noisy = x + sigma * noise ; net input = c_in * x_noisy
    x_noisy = x + sig * noise
    x_in = (c_in * x_noisy).astype(w1_ref.dtype)        # bf16 feed for the MXU

    # synthetic pointwise-MLP "net", run as ONE (Bb*Tt, C) @ (C, H) matmul
    # (leading-dim collapse is layout-free since Tt is a multiple of 8).
    mm1 = jnp.dot(x_in.reshape(Bb * Tt, C), w1_ref[...],
                  preferred_element_type=jnp.float32).reshape(Bb, Tt, H)
    h = jnp.tanh(mm1 + t * e1_ref[...])                 # t-conditioning, f32
    x_pred = jnp.dot(h.astype(w2_ref.dtype).reshape(Bb * Tt, H), w2_ref[...],
                     preferred_element_type=jnp.float32).reshape(Bb, Tt, C)

    # v_target = (x - c_skip * x_noisy) / (c_out + 1e-7); reciprocal is
    # precomputed per batch element in the wrapper -> multiply only.
    v_target = (x - c_skip * x_noisy) * inv_c_out
    diff = x_pred - v_target

    # One partial squared-error sum per grid step (single cross-lane reduce).
    out_ref[...] = jnp.broadcast_to(jnp.sum(diff * diff), (1, 1, 1, 1))


def _pick_blocks(B, T, C, budget_bytes=8 << 20):
    """Pick (Bb, Tt): largest batch/time block whose double-buffered x/noise
    tiles fit a conservative VMEM budget (safe for v7x's smaller VMEM).
    Tt stays a multiple of 8 (layout-free reshape, (8,128) rule)."""
    def fits(bb, tt):
        return 4 * bb * tt * C * 4 <= budget_bytes      # 2 inputs x 2 buffers
    t_tiles = [t for t in range(T, 0, -1)
               if T % t == 0 and (t % 8 == 0 or t == T)]
    for tt in t_tiles:
        for bb in range(B, 0, -1):
            if B % bb == 0 and fits(bb, tt):
                return bb, tt
    return 1, (t_tiles[-1] if t_tiles else T)


def vk_diffusion_loss(x, noise, sigmas, w1, e1, w2, *, block_b=None,
                      block_t=None):
    """x, noise: [B, T, C] f32; sigmas: [B] f32; w1/w2 bf16. Returns MSE loss."""
    B, T, C = x.shape
    H = w1.shape[1]
    bb, tt = _pick_blocks(B, T, C)
    block_b = bb if block_b is None else block_b
    block_t = tt if block_t is None else block_t
    assert B % block_b == 0 and T % block_t == 0
    Gb, Gt = B // block_b, T // block_t

    # Per-batch scalar "glue" (get_scale_weights / sigma_to_t): B values each,
    # precomputed once here, packed into one (B, 1, 8) array (sigma_data = 1).
    s = sigmas.astype(jnp.float32)
    s2 = s * s
    c_skip = 1.0 / (s2 + 1.0)
    c_in = jax.lax.rsqrt(s2 + 1.0)
    c_out = -s * c_in
    inv_c_out = 1.0 / (c_out + 1e-7)
    t = jnp.arctan(s) * (2.0 / math.pi)
    zeros = jnp.zeros_like(s)
    coef = jnp.stack([s, c_skip, c_in, inv_c_out, t, zeros, zeros, zeros],
                     axis=-1).reshape(B, 1, 8)

    data_spec = pl.BlockSpec((block_b, block_t, C), lambda gb, gt: (gb, gt, 0))

    partials = pl.pallas_call(
        vk_diffusion_kernel,
        out_shape=jax.ShapeDtypeStruct((Gb, Gt, 1, 1), jnp.float32),
        grid_spec=pltpu.PrefetchScalarGridSpec(
            num_scalar_prefetch=0,
            grid=(Gb, Gt),
            in_specs=[
                data_spec,                                        # x
                data_spec,                                        # noise
                pl.BlockSpec((block_b, 1, 8), lambda gb, gt: (gb, 0, 0)),
                pl.BlockSpec((C, H), lambda gb, gt: (0, 0)),      # W1 (bf16)
                pl.BlockSpec((1, H), lambda gb, gt: (0, 0)),      # e1 (f32)
                pl.BlockSpec((H, C), lambda gb, gt: (0, 0)),      # W2 (bf16)
            ],
            out_specs=pl.BlockSpec((1, 1, 1, 1),
                                   lambda gb, gt: (gb, gt, 0, 0)),
        ),
        compiler_params=pltpu.CompilerParams(
            dimension_semantics=("parallel", "parallel")),
    )(x, noise, coef, w1, e1, w2)

    # finalize: mean over all elements (F.mse_loss default reduction)
    return jnp.sum(partials) / (B * T * C)


def reference_loss(x, noise, sigmas, w1, e1, w2):
    """Pure-JAX reference of VKDiffusion.forward with the same synthetic net
    (same bf16 matmul inputs, f32 accumulation and f32 elementwise math)."""
    s = sigmas[:, None, None]
    x_noisy = x + s * noise
    c_skip = 1.0 / (s * s + 1.0)
    c_in = jax.lax.rsqrt(s * s + 1.0)
    c_out = -s * c_in
    t = jnp.arctan(sigmas) * (2.0 / math.pi)
    x_in = (c_in * x_noisy).astype(w1.dtype)
    h = jnp.tanh(jnp.einsum('btc,ch->bth', x_in, w1,
                            preferred_element_type=jnp.float32)
                 + t[:, None, None] * e1[None])
    x_pred = jnp.einsum('bth,hc->btc', h.astype(w2.dtype), w2,
                        preferred_element_type=jnp.float32)
    v_target = (x - c_skip * x_noisy) / (c_out + 1e-7)
    return jnp.mean((x_pred - v_target) ** 2)


if __name__ == "__main__":
    key = jax.random.PRNGKey(0)
    B, C, T, H = 4, 128, 64, 128
    k1, k2, k3, k4, k5, k6 = jax.random.split(key, 6)

    # PyTorch layout is [B, C, T]; build there, transpose to kernel layout.
    x_bct = jax.random.normal(k1, (B, C, T), jnp.float32)
    noise_bct = jax.random.normal(k2, (B, C, T), jnp.float32)
    # sigma_distribution(num_samples=B) stand-in
    sigmas = jax.random.uniform(k3, (B,), jnp.float32, minval=0.1, maxval=1.0)

    # deterministic synthetic net parameters (bf16 weights for the MXU)
    w1 = (jax.random.normal(k4, (C, H), jnp.float32)
          * (1.0 / math.sqrt(C))).astype(jnp.bfloat16)
    e1 = jax.random.normal(k5, (1, H), jnp.float32)
    w2 = (jax.random.normal(k6, (H, C), jnp.float32)
          * (1.0 / math.sqrt(H))).astype(jnp.bfloat16)

    x = jnp.transpose(x_bct, (0, 2, 1))        # [B, T, C]
    noise = jnp.transpose(noise_bct, (0, 2, 1))

    loss = vk_diffusion_loss(x, noise, sigmas, w1, e1, w2)
    jax.block_until_ready(loss)

    ref = reference_loss(x, noise, sigmas, w1, e1, w2)
    assert jnp.allclose(loss, ref, rtol=5e-3, atol=1e-5), (loss, ref)

    print("KERNEL_OK")
</pallas_src>

<mosaic_0001>
module attributes {stable_mosaic.version = 11 : i64} {
  func.func @vk_diffusion_kernel(%arg0: i32, %arg1: i32, %arg2: memref<4x64x128xf32, #tpu.memory_space<vmem>>, %arg3: memref<4x64x128xf32, #tpu.memory_space<vmem>>, %arg4: memref<4x1x8xf32, #tpu.memory_space<vmem>>, %arg5: memref<128x128xbf16, #tpu.memory_space<vmem>>, %arg6: memref<1x128xf32, #tpu.memory_space<vmem>>, %arg7: memref<128x128xbf16, #tpu.memory_space<vmem>>, %arg8: memref<1x1x1x1xf32, #tpu.memory_space<vmem>>) attributes {dimension_semantics = [#tpu.dimension_semantics<parallel>, #tpu.dimension_semantics<parallel>], iteration_bounds = array<i64: 1, 1>, scalar_prefetch = 0 : i64, scratch_operands = 0 : i64, tpu.core_type = #tpu.core_type<tc>, window_params = [{transform_indices = @transform_0, window_bounds = array<i64: 4, 64, 128>}, {transform_indices = @transform_1, window_bounds = array<i64: 4, 64, 128>}, {transform_indices = @transform_2, window_bounds = array<i64: 4, 1, 8>}, {pipeline_mode = #tpu.pipeline_mode<synchronous>, transform_indices = @transform_3, window_bounds = array<i64: 128, 128>}, {pipeline_mode = #tpu.pipeline_mode<synchronous>, transform_indices = @transform_4, window_bounds = array<i64: 1, 128>}, {pipeline_mode = #tpu.pipeline_mode<synchronous>, transform_indices = @transform_5, window_bounds = array<i64: 128, 128>}, {transform_indices = @transform_6, window_bounds = array<i64: 1, 1, 1, 1>}]} {
    %c0 = arith.constant 0 : index
    %c0_0 = arith.constant 0 : index
    %c0_1 = arith.constant 0 : index
    %0 = vector.load %arg2[%c0, %c0_0, %c0_1] : memref<4x64x128xf32, #tpu.memory_space<vmem>>, vector<4x64x128xf32>
    %c0_2 = arith.constant 0 : index
    %c0_3 = arith.constant 0 : index
    %c0_4 = arith.constant 0 : index
    %1 = vector.load %arg3[%c0_2, %c0_3, %c0_4] : memref<4x64x128xf32, #tpu.memory_space<vmem>>, vector<4x64x128xf32>
    %c0_5 = arith.constant 0 : index
    %c0_6 = arith.constant 0 : index
    %c0_7 = arith.constant 0 : index
    %2 = vector.load %arg4[%c0_5, %c0_6, %c0_7] : memref<4x1x8xf32, #tpu.memory_space<vmem>>, vector<4x1x8xf32>
    %3 = vector.extract_strided_slice %2 {offsets = [0, 0, 0], sizes = [4, 1, 1], strides = [1, 1, 1]} : vector<4x1x8xf32> to vector<4x1x1xf32>
    %4 = vector.extract_strided_slice %2 {offsets = [0, 0, 1], sizes = [4, 1, 1], strides = [1, 1, 1]} : vector<4x1x8xf32> to vector<4x1x1xf32>
    %5 = vector.extract_strided_slice %2 {offsets = [0, 0, 2], sizes = [4, 1, 1], strides = [1, 1, 1]} : vector<4x1x8xf32> to vector<4x1x1xf32>
    %6 = vector.extract_strided_slice %2 {offsets = [0, 0, 3], sizes = [4, 1, 1], strides = [1, 1, 1]} : vector<4x1x8xf32> to vector<4x1x1xf32>
    %7 = vector.extract_strided_slice %2 {offsets = [0, 0, 4], sizes = [4, 1, 1], strides = [1, 1, 1]} : vector<4x1x8xf32> to vector<4x1x1xf32>
    %8 = vector.broadcast %3 : vector<4x1x1xf32> to vector<4x64x128xf32>
    %9 = arith.mulf %8, %1 : vector<4x64x128xf32>
    %10 = arith.addf %0, %9 : vector<4x64x128xf32>
    %11 = vector.broadcast %5 : vector<4x1x1xf32> to vector<4x64x128xf32>
    %12 = arith.mulf %11, %10 : vector<4x64x128xf32>
    %13 = arith.truncf %12 : vector<4x64x128xf32> to vector<4x64x128xbf16>
    %14 = vector.shape_cast %13 : vector<4x64x128xbf16> to vector<256x128xbf16>
    %c0_8 = arith.constant 0 : index
    %c0_9 = arith.constant 0 : index
    %15 = vector.load %arg5[%c0_8, %c0_9] : memref<128x128xbf16, #tpu.memory_space<vmem>>, vector<128x128xbf16>
    %cst = arith.constant dense<0.000000e+00> : vector<256x128xf32>
    %16 = tpu.matmul %14, %15, %cst {dimension_numbers = #tpu.dot_dimension_numbers<[1], [0], [0], [1], [0, 0, 1, 1], [], []>} : vector<256x128xbf16>, vector<128x128xbf16>, vector<256x128xf32> -> vector<256x128xf32>
    %17 = vector.shape_cast %16 : vector<256x128xf32> to vector<4x64x128xf32>
    %c0_10 = arith.constant 0 : index
    %c0_11 = arith.constant 0 : index
    %18 = vector.load %arg6[%c0_10, %c0_11] : memref<1x128xf32, #tpu.memory_space<vmem>>, vector<1x128xf32>
    %19 = vector.shape_cast %18 : vector<1x128xf32> to vector<1x1x128xf32>
    %20 = vector.broadcast %7 : vector<4x1x1xf32> to vector<4x1x128xf32>
    %21 = vector.broadcast %19 : vector<1x1x128xf32> to vector<4x1x128xf32>
    %22 = arith.mulf %20, %21 : vector<4x1x128xf32>
    %23 = vector.broadcast %22 : vector<4x1x128xf32> to vector<4x64x128xf32>
    %24 = arith.addf %17, %23 : vector<4x64x128xf32>
    %25 = math.tanh %24 : vector<4x64x128xf32>
    %26 = arith.truncf %25 : vector<4x64x128xf32> to vector<4x64x128xbf16>
    %27 = vector.shape_cast %26 : vector<4x64x128xbf16> to vector<256x128xbf16>
    %c0_12 = arith.constant 0 : index
    %c0_13 = arith.constant 0 : index
    %28 = vector.load %arg7[%c0_12, %c0_13] : memref<128x128xbf16, #tpu.memory_space<vmem>>, vector<128x128xbf16>
    %cst_14 = arith.constant dense<0.000000e+00> : vector<256x128xf32>
    %29 = tpu.matmul %27, %28, %cst_14 {dimension_numbers = #tpu.dot_dimension_numbers<[1], [0], [0], [1], [0, 0, 1, 1], [], []>} : vector<256x128xbf16>, vector<128x128xbf16>, vector<256x128xf32> -> vector<256x128xf32>
    %30 = vector.shape_cast %29 : vector<256x128xf32> to vector<4x64x128xf32>
    %31 = vector.broadcast %4 : vector<4x1x1xf32> to vector<4x64x128xf32>
    %32 = arith.mulf %31, %10 : vector<4x64x128xf32>
    %33 = arith.subf %0, %32 : vector<4x64x128xf32>
    %34 = vector.broadcast %6 : vector<4x1x1xf32> to vector<4x64x128xf32>
    %35 = arith.mulf %33, %34 : vector<4x64x128xf32>
    %36 = arith.subf %30, %35 : vector<4x64x128xf32>
    %37 = arith.mulf %36, %36 : vector<4x64x128xf32>
    %38 = vector.shape_cast %37 : vector<4x64x128xf32> to vector<1x4x64x128xf32>
    %cst_15 = arith.constant dense<0.000000e+00> : vector<1xf32>
    %39 = vector.multi_reduction <add>, %38, %cst_15 [1, 2, 3] : vector<1x4x64x128xf32> to vector<1xf32>
    %40 = vector.shape_cast %39 : vector<1xf32> to vector<1x1x1x1xf32>
    %41 = vector.extract %40[0, 0, 0, 0] : f32 from vector<1x1x1x1xf32>
    %42 = vector.broadcast %41 : f32 to vector<1x1x1x1xf32>
    %c0_16 = arith.constant 0 : index
    %c0_17 = arith.constant 0 : index
    %c0_18 = arith.constant 0 : index
    %c0_19 = arith.constant 0 : index
    %43 = vector.load %arg8[%c0_16, %c0_17, %c0_18, %c0_19] : memref<1x1x1x1xf32, #tpu.memory_space<vmem>>, vector<1x1x1x1xf32>
    tpu.vector_store %arg8[%c0_16, %c0_17, %c0_18, %c0_19], %42 {strides = array<i32>} : memref<1x1x1x1xf32, #tpu.memory_space<vmem>>, vector<1x1x1x1xf32>,
    return
  }
  func.func @transform_0(%arg0: i32, %arg1: i32) -> (i32, i32, i32) {
    %c0_i32 = arith.constant 0 : i32
    %c0_i32_0 = arith.constant 0 : i32
    return %arg0, %arg1, %c0_i32 : i32, i32, i32
  }
  func.func @transform_1(%arg0: i32, %arg1: i32) -> (i32, i32, i32) {
    %c0_i32 = arith.constant 0 : i32
    %c0_i32_0 = arith.constant 0 : i32
    return %arg0, %arg1, %c0_i32 : i32, i32, i32
  }
  func.func @transform_2(%arg0: i32, %arg1: i32) -> (i32, i32, i32) {
    %c0_i32 = arith.constant 0 : i32
    %c0_i32_0 = arith.constant 0 : i32
    %c0_i32_1 = arith.constant 0 : i32
    return %arg0, %c0_i32, %c0_i32_0 : i32, i32, i32
  }
  func.func @transform_3(%arg0: i32, %arg1: i32) -> (i32, i32) {
    %c0_i32 = arith.constant 0 : i32
    %c0_i32_0 = arith.constant 0 : i32
    %c0_i32_1 = arith.constant 0 : i32
    return %c0_i32, %c0_i32_0 : i32, i32
  }
  func.func @transform_4(%arg0: i32, %arg1: i32) -> (i32, i32) {
    %c0_i32 = arith.constant 0 : i32
    %c0_i32_0 = arith.constant 0 : i32
    %c0_i32_1 = arith.constant 0 : i32
    return %c0_i32, %c0_i32_0 : i32, i32
  }
  func.func @transform_5(%arg0: i32, %arg1: i32) -> (i32, i32) {
    %c0_i32 = arith.constant 0 : i32
    %c0_i32_0 = arith.constant 0 : i32
    %c0_i32_1 = arith.constant 0 : i32
    return %c0_i32, %c0_i32_0 : i32, i32
  }
  func.func @transform_6(%arg0: i32, %arg1: i32) -> (i32, i32, i32, i32) {
    %c0_i32 = arith.constant 0 : i32
    %c0_i32_0 = arith.constant 0 : i32
    %c0_i32_1 = arith.constant 0 : i32
    return %arg0, %arg1, %c0_i32, %c0_i32_0 : i32, i32, i32, i32
  }
}

</mosaic_0001>

<llo_original>
// kernel: tpu_custom_call.1
$region0: #{tpu_custom_call.1}
  #allocation0 [shape = 'u32[]', space=smem, size = 0x4, offset = 0x4, fixed_abs, tag = 'smem constant byte address 0x4 - core index']
  #allocation1 [shape = 'u32[144,128]{1,0:T(1,128)}', space=vmem, size = 0x12000, scoped, tag = 'internal scratch']
  %s0 = inlined_call_operand.hbm [shape: f32[4,64,128], index: 0, kind: input, shape index: {}]
  %s1 = inlined_call_operand.hbm [shape: f32[4,64,128], index: 1, kind: input, shape index: {}]
  %s2 = inlined_call_operand.hbm [shape: f32[4,1,8], index: 2, kind: input, shape index: {}]
  %s3 = inlined_call_operand.hbm [shape: bf16[128,128], index: 3, kind: input, shape index: {}]
  %s4 = inlined_call_operand.vmem [shape: f32[1,128], index: 4, kind: input, shape index: {}]
  %s5 = inlined_call_operand.hbm [shape: bf16[128,128], index: 5, kind: input, shape index: {}]
  %s6 = inlined_call_operand.hbm [shape: f32[1,1,1,1], index: 6, kind: output, shape index: {}]
  %s7 = sld [smem:[#allocation0]]
  $region54: #{tpu_custom_call.1} parent=0
    _
  %s9 = ssub.s32 1, %s7
  %s10 = scalar_select 0, %s9, %s7
  $region1: #{tpu_custom_call.1} parent=0
    #allocation2 [shape = 'u8[131072]{0}', space=vmem, size = 0x20000, scoped, tag = 'input window, operand 0, single buffered']
    #allocation3 [shape = 's32[1]{0}', space=sflag, size = 0x4, scoped, tag = 'scoped memory for tpu_custom_call.1']
    #allocation4 [shape = 's32[1]{0}', space=sflag, size = 0x4, scoped, tag = 'scoped memory for tpu_custom_call.1']
    #allocation5 [shape = 'u8[131072]{0}', space=vmem, size = 0x20000, scoped, tag = 'input window, operand 1, single buffered']
    #allocation6 [shape = 's32[1]{0}', space=sflag, size = 0x4, scoped, tag = 'scoped memory for tpu_custom_call.1']
    #allocation7 [shape = 'u8[2048]{0}', space=vmem, size = 0x800, scoped, tag = 'input window, operand 2, single buffered']
    #allocation8 [shape = 'u8[32768]{0}', space=vmem, size = 0x8000, scoped, tag = 'input window, operand 3, single buffered']
    #allocation9 [shape = 's32[1]{0}', space=sflag, size = 0x4, scoped, tag = 'scoped memory for tpu_custom_call.1']
    #allocation10 [shape = 'u8[32768]{0}', space=vmem, size = 0x8000, scoped, tag = 'input window, operand 5, single buffered']
    #allocation11 [shape = 'u8[512]{0}', space=vmem, size = 0x400, scoped, tag = 'output window, operand 0, single buffered']
    %11 = vsyncpa [#allocation3], 0
    %12 = vsyncpa [#allocation6], 0
    %13 = vsyncpa [#allocation9], 0
    %14 = vsyncpa [#allocation4], 0
    // Predicated region
    $region2: #{tpu_custom_call.1} parent=1 // pred_check
      _
    $region3: #{tpu_custom_call.1} parent=1 // pred_check_branch
      %16 = sbr.rel (0) target = $region5
    $region4: #{tpu_custom_call.1} parent=1 // pred_region
      %s18 = ssub.s32 4096, 4096
      %19 = vsyncadd [#allocation3], %s18
      %s20 = sshll.u32 [#allocation2], 4
      %s21 = int_to_ptr.vmem [resolvable:$true] %s20
      %26 = dma.hbm_to_vmem [thread:$0]  %s0, 4096, %s21, [#allocation3], 128, 128, 8
    $region5: #{tpu_custom_call.1} parent=1 // pred_fallthru
      _
    // Predicated region
    $region6: #{tpu_custom_call.1} parent=1 // pred_check
      _
    $region7: #{tpu_custom_call.1} parent=1 // pred_check_branch
      %28 = sbr.rel (0) target = $region9
    $region8: #{tpu_custom_call.1} parent=1 // pred_region
      %s30 = ssub.s32 4096, 4096
      %31 = vsyncadd [#allocation6], %s30
      %s32 = sshll.u32 [#allocation5], 4
      %s33 = int_to_ptr.vmem [resolvable:$true] %s32
      %38 = dma.hbm_to_vmem [thread:$0]  %s1, 4096, %s33, [#allocation6], 128, 128, 8
    $region9: #{tpu_custom_call.1} parent=1 // pred_fallthru
      _
    // Predicated region
    $region10: #{tpu_custom_call.1} parent=1 // pred_check
      _
    $region11: #{tpu_custom_call.1} parent=1 // pred_check_branch
      %40 = sbr.rel (0) target = $region13
    $region12: #{tpu_custom_call.1} parent=1 // pred_region
      %s42 = ssub.s32 64, 64
      %43 = vsyncadd [#allocation6], %s42
      %s44 = sshll.u32 [#allocation7], 4
      %s45 = int_to_ptr.vmem [resolvable:$true] %s44
      %50 = dma.hbm_to_vmem [thread:$0]  %s2, 64, %s45, [#allocation6], 16, 16, 1
    $region13: #{tpu_custom_call.1} parent=1 // pred_fallthru
      _
    // Predicated region
    $region14: #{tpu_custom_call.1} parent=1 // pred_check
      _
    $region15: #{tpu_custom_call.1} parent=1 // pred_check_branch
      %52 = sbr.rel (0) target = $region17
    $region16: #{tpu_custom_call.1} parent=1 // pred_region
      %s54 = ssub.s32 1024, 1024
      %55 = vsyncadd [#allocation9], %s54
      %s56 = sshll.u32 [#allocation8], 4
      %s57 = int_to_ptr.vmem [resolvable:$true] %s56
      %62 = dma.hbm_to_vmem [thread:$0]  %s3, 1024, %s57, [#allocation9], 64, 64, 4
    $region17: #{tpu_custom_call.1} parent=1 // pred_fallthru
      _
    // Predicated region
    $region18: #{tpu_custom_call.1} parent=1 // pred_check
      _
    $region19: #{tpu_custom_call.1} parent=1 // pred_check_branch
      %64 = sbr.rel (0) target = $region21
    $region20: #{tpu_custom_call.1} parent=1 // pred_region
      _
    $region21: #{tpu_custom_call.1} parent=1 // pred_fallthru
      _
    // Predicated region
    $region22: #{tpu_custom_call.1} parent=1 // pred_check
      _
    $region23: #{tpu_custom_call.1} parent=1 // pred_check_branch
      %66 = sbr.rel (0) target = $region25
    $region24: #{tpu_custom_call.1} parent=1 // pred_region
      %s68 = ssub.s32 1024, 1024
      %69 = vsyncadd [#allocation9], %s68
      %s70 = sshll.u32 [#allocation10], 4
      %s71 = int_to_ptr.vmem [resolvable:$true] %s70
      %76 = dma.hbm_to_vmem [thread:$0]  %s5, 1024, %s71, [#allocation9], 64, 64, 4
    $region25: #{tpu_custom_call.1} parent=1 // pred_fallthru
      _
    // Predicated region
    $region26: #{tpu_custom_call.1} parent=1 // pred_check
      _
    $region27: #{tpu_custom_call.1} parent=1 // pred_check_branch
      %78 = sbr.rel (0) target = $region29
    $region28: #{tpu_custom_call.1} parent=1 // pred_region
      %79 = dma.done [#allocation3], 4096
    $region29: #{tpu_custom_call.1} parent=1 // pred_fallthru
      _
    // Predicated region
    $region30: #{tpu_custom_call.1} parent=1 // pred_check
      _
    $region31: #{tpu_custom_call.1} parent=1 // pred_check_branch
      %81 = sbr.rel (0) target = $region33
    $region32: #{tpu_custom_call.1} parent=1 // pred_region
      %82 = dma.done [#allocation6], 4096
    $region33: #{tpu_custom_call.1} parent=1 // pred_fallthru
      _
    // Predicated region
    $region34: #{tpu_custom_call.1} parent=1 // pred_check
      _
    $region35: #{tpu_custom_call.1} parent=1 // pred_check_branch
      %84 = sbr.rel (0) target = $region37
    $region36: #{tpu_custom_call.1} parent=1 // pred_region
      %85 = dma.done [#allocation6], 64
    $region37: #{tpu_custom_call.1} parent=1 // pred_fallthru
      _
    // Predicated region
    $region38: #{tpu_custom_call.1} parent=1 // pred_check
      _
    $region39: #{tpu_custom_call.1} parent=1 // pred_check_branch
      %87 = sbr.rel (0) target = $region41
    $region40: #{tpu_custom_call.1} parent=1 // pred_region
      %88 = dma.done [#allocation9], 1024
    $region41: #{tpu_custom_call.1} parent=1 // pred_fallthru
      _
    // Predicated region
    $region42: #{tpu_custom_call.1} parent=1 // pred_check
      _
    $region43: #{tpu_custom_call.1} parent=1 // pred_check_branch
      %90 = sbr.rel (0) target = $region45
    $region44: #{tpu_custom_call.1} parent=1 // pred_region
      %91 = dma.done [#allocation9], 1024
    $region45: #{tpu_custom_call.1} parent=1 // pred_fallthru
      _
    %v93 = vld [vmem:[#allocation2] sm:$0xff]
    %v94 = vld [vmem:[#allocation2 + $0x8] sm:$0xff]
    %v95 = vld [vmem:[#allocation2 + $0x10] sm:$0xff]
    %v96 = vld [vmem:[#allocation2 + $0x18] sm:$0xff]
    %v97 = vld [vmem:[#allocation2 + $0x20] sm:$0xff]
    %v98 = vld [vmem:[#allocation2 + $0x28] sm:$0xff]
    %v99 = vld [vmem:[#allocation2 + $0x30] sm:$0xff]
    %v100 = vld [vmem:[#allocation2 + $0x38] sm:$0xff]
    %v101 = vld [vmem:[#allocation2 + $0x40] sm:$0xff]
    %v102 = vld [vmem:[#allocation2 + $0x48] sm:$0xff]
    %v103 = vld [vmem:[#allocation2 + $0x50] sm:$0xff]
    %v104 = vld [vmem:[#allocation2 + $0x58] sm:$0xff]
    %v105 = vld [vmem:[#allocation2 + $0x60] sm:$0xff]
    %v106 = vld [vmem:[#allocation2 + $0x68] sm:$0xff]
    %v107 = vld [vmem:[#allocation2 + $0x70] sm:$0xff]
    %v108 = vld [vmem:[#allocation2 + $0x78] sm:$0xff]
    %v109 = vld [vmem:[#allocation2 + $0x80] sm:$0xff]
    %v110 = vld [vmem:[#allocation2 + $0x88] sm:$0xff]
    %v111 = vld [vmem:[#allocation2 + $0x90] sm:$0xff]
    %v112 = vld [vmem:[#allocation2 + $0x98] sm:$0xff]
    %v113 = vld [vmem:[#allocation2 + $0xa0] sm:$0xff]
    %v114 = vld [vmem:[#allocation2 + $0xa8] sm:$0xff]
    %v115 = vld [vmem:[#allocation2 + $0xb0] sm:$0xff]
    %v116 = vld [vmem:[#allocation2 + $0xb8] sm:$0xff]
    %v117 = vld [vmem:[#allocation2 + $0xc0] sm:$0xff]
    %v118 = vld [vmem:[#allocation2 + $0xc8] sm:$0xff]
    %v119 = vld [vmem:[#allocation2 + $0xd0] sm:$0xff]
    %v120 = vld [vmem:[#allocation2 + $0xd8] sm:$0xff]
    %v121 = vld [vmem:[#allocation2 + $0xe0] sm:$0xff]
    %v122 = vld [vmem:[#allocation2 + $0xe8] sm:$0xff]
    %v123 = vld [vmem:[#allocation2 + $0xf0] sm:$0xff]
    %v124 = vld [vmem:[#allocation2 + $0xf8] sm:$0xff]
    %v125 = vld [vmem:[#allocation5] sm:$0xff]
    %v126 = vld [vmem:[#allocation5 + $0x8] sm:$0xff]
    %v127 = vld [vmem:[#allocation5 + $0x10] sm:$0xff]
    %v128 = vld [vmem:[#allocation5 + $0x18] sm:$0xff]
    %v129 = vld [vmem:[#allocation5 + $0x20] sm:$0xff]
    %v130 = vld [vmem:[#allocation5 + $0x28] sm:$0xff]
    %v131 = vld [vmem:[#allocation5 + $0x30] sm:$0xff]
    %v132 = vld [vmem:[#allocation5 + $0x38] sm:$0xff]
    %v133 = vld [vmem:[#allocation5 + $0x40] sm:$0xff]
    %v134 = vld [vmem:[#allocation5 + $0x48] sm:$0xff]
    %v135 = vld [vmem:[#allocation5 + $0x50] sm:$0xff]
    %v136 = vld [vmem:[#allocation5 + $0x58] sm:$0xff]
    %v137 = vld [vmem:[#allocation5 + $0x60] sm:$0xff]
    %v138 = vld [vmem:[#allocation5 + $0x68] sm:$0xff]
    %v139 = vld [vmem:[#allocation5 + $0x70] sm:$0xff]
    %v140 = vld [vmem:[#allocation5 + $0x78] sm:$0xff]
    %v141 = vld [vmem:[#allocation5 + $0x80] sm:$0xff]
    %v142 = vld [vmem:[#allocation5 + $0x88] sm:$0xff]
    %v143 = vld [vmem:[#allocation5 + $0x90] sm:$0xff]
    %v144 = vld [vmem:[#allocation5 + $0x98] sm:$0xff]
    %v145 = vld [vmem:[#allocation5 + $0xa0] sm:$0xff]
    %v146 = vld [vmem:[#allocation5 + $0xa8] sm:$0xff]
    %v147 = vld [vmem:[#allocation5 + $0xb0] sm:$0xff]
    %v148 = vld [vmem:[#allocation5 + $0xb8] sm:$0xff]
    %v149 = vld [vmem:[#allocation5 + $0xc0] sm:$0xff]
    %v150 = vld [vmem:[#allocation5 + $0xc8] sm:$0xff]
    %v151 = vld [vmem:[#allocation5 + $0xd0] sm:$0xff]
    %v152 = vld [vmem:[#allocation5 + $0xd8] sm:$0xff]
    %v153 = vld [vmem:[#allocation5 + $0xe0] sm:$0xff]
    %v154 = vld [vmem:[#allocation5 + $0xe8] sm:$0xff]
    %v155 = vld [vmem:[#allocation5 + $0xf0] sm:$0xff]
    %v156 = vld [vmem:[#allocation5 + $0xf8] sm:$0xff]
    %v157 = vld [vmem:[#allocation7] sm:$0x1]
    %v158 = vld [vmem:[#allocation7 + $0x1] sm:$0x1]
    %v159 = vld [vmem:[#allocation7 + $0x2] sm:$0x1]
    %v160 = vld [vmem:[#allocation7 + $0x3] sm:$0x1]
    %v165 = vlaneseq
    %v166 = vshrl.u32 %v165, 7
    %v167 = vsub.s32 0, %v166
    %v168 = vrot.slane %v157, %v167
    %v169 = vlaneseq
    %v170 = vshrl.u32 %v169, 7
    %v171 = vsub.s32 0, %v170
    %v172 = vrot.slane %v158, %v171
    %v173 = vlaneseq
    %v174 = vshrl.u32 %v173, 7
    %v175 = vsub.s32 0, %v174
    %v176 = vrot.slane %v159, %v175
    %v177 = vlaneseq
    %v178 = vshrl.u32 %v177, 7
    %v179 = vsub.s32 0, %v178
    %v180 = vrot.slane %v160, %v179
    %181 = vset.pattern.permute.xlu0 0
    %182 = vperm.xlu0 %181, %v168
    %v183 = vpop.permute.xlu0 %182
    %185 = vset.pattern.permute.xlu0 0
    %186 = vperm.xlu0 %185, %v172
    %v187 = vpop.permute.xlu0 %186
    %189 = vset.pattern.permute.xlu0 0
    %190 = vperm.xlu0 %189, %v176
    %v191 = vpop.permute.xlu0 %190
    %193 = vset.pattern.permute.xlu0 0
    %194 = vperm.xlu0 %193, %v180
    %v195 = vpop.permute.xlu0 %194
    %v197 = vmul.f32 %v183, %v125
    %v198 = vmul.f32 %v183, %v126
    %v199 = vmul.f32 %v183, %v127
    %v200 = vmul.f32 %v183, %v128
    %v201 = vmul.f32 %v183, %v129
    %v202 = vmul.f32 %v183, %v130
    %v203 = vmul.f32 %v183, %v131
    %v204 = vmul.f32 %v183, %v132
    %v205 = vmul.f32 %v187, %v133
    %v206 = vmul.f32 %v187, %v134
    %v207 = vmul.f32 %v187, %v135
    %v208 = vmul.f32 %v187, %v136
    %v209 = vmul.f32 %v187, %v137
    %v210 = vmul.f32 %v187, %v138
    %v211 = vmul.f32 %v187, %v139
    %v212 = vmul.f32 %v187, %v140
    %v213 = vmul.f32 %v191, %v141
    %v214 = vmul.f32 %v191, %v142
    %v215 = vmul.f32 %v191, %v143
    %v216 = vmul.f32 %v191, %v144
    %v217 = vmul.f32 %v191, %v145
    %v218 = vmul.f32 %v191, %v146
    %v219 = vmul.f32 %v191, %v147
    %v220 = vmul.f32 %v191, %v148
    %v221 = vmul.f32 %v195, %v149
    %v222 = vmul.f32 %v195, %v150
    %v223 = vmul.f32 %v195, %v151
    %v224 = vmul.f32 %v195, %v152
    %v225 = vmul.f32 %v195, %v153
    %v226 = vmul.f32 %v195, %v154
    %v227 = vmul.f32 %v195, %v155
    %v228 = vmul.f32 %v195, %v156
    %v229 = vadd.f32 %v93, %v197
    %v230 = vadd.f32 %v94, %v198
    %v231 = vadd.f32 %v95, %v199
    %v232 = vadd.f32 %v96, %v200
    %v233 = vadd.f32 %v97, %v201
    %v234 = vadd.f32 %v98, %v202
    %v235 = vadd.f32 %v99, %v203
    %v236 = vadd.f32 %v100, %v204
    %v237 = vadd.f32 %v101, %v205
    %v238 = vadd.f32 %v102, %v206
    %v239 = vadd.f32 %v103, %v207
    %v240 = vadd.f32 %v104, %v208
    %v241 = vadd.f32 %v105, %v209
    %v242 = vadd.f32 %v106, %v210
    %v243 = vadd.f32 %v107, %v211
    %v244 = vadd.f32 %v108, %v212
    %v245 = vadd.f32 %v109, %v213
    %v246 = vadd.f32 %v110, %v214
    %v247 = vadd.f32 %v111, %v215
    %v248 = vadd.f32 %v112, %v216
    %v249 = vadd.f32 %v113, %v217
    %v250 = vadd.f32 %v114, %v218
    %v251 = vadd.f32 %v115, %v219
    %v252 = vadd.f32 %v116, %v220
    %v253 = vadd.f32 %v117, %v221
    %v254 = vadd.f32 %v118, %v222
    %v255 = vadd.f32 %v119, %v223
    %v256 = vadd.f32 %v120, %v224
    %v257 = vadd.f32 %v121, %v225
    %v258 = vadd.f32 %v122, %v226
    %v259 = vadd.f32 %v123, %v227
    %v260 = vadd.f32 %v124, %v228
    %261 = vset.pattern.permute.xlu0 2
    %262 = vperm.xlu0 %261, %v168
    %v263 = vpop.permute.xlu0 %262
    %265 = vset.pattern.permute.xlu0 2
    %266 = vperm.xlu0 %265, %v172
    %v267 = vpop.permute.xlu0 %266
    %269 = vset.pattern.permute.xlu0 2
    %270 = vperm.xlu0 %269, %v176
    %v271 = vpop.permute.xlu0 %270
    %273 = vset.pattern.permute.xlu0 2
    %274 = vperm.xlu0 %273, %v180
    %v275 = vpop.permute.xlu0 %274
    %v277 = vmul.f32 %v263, %v229
    %v278 = vmul.f32 %v263, %v230
    %v279 = vmul.f32 %v263, %v231
    %v280 = vmul.f32 %v263, %v232
    %v281 = vmul.f32 %v263, %v233
    %v282 = vmul.f32 %v263, %v234
    %v283 = vmul.f32 %v263, %v235
    %v284 = vmul.f32 %v263, %v236
    %v285 = vmul.f32 %v267, %v237
    %v286 = vmul.f32 %v267, %v238
    %v287 = vmul.f32 %v267, %v239
    %v288 = vmul.f32 %v267, %v240
    %v289 = vmul.f32 %v267, %v241
    %v290 = vmul.f32 %v267, %v242
    %v291 = vmul.f32 %v267, %v243
    %v292 = vmul.f32 %v267, %v244
    %v293 = vmul.f32 %v271, %v245
    %v294 = vmul.f32 %v271, %v246
    %v295 = vmul.f32 %v271, %v247
    %v296 = vmul.f32 %v271, %v248
    %v297 = vmul.f32 %v271, %v249
    %v298 = vmul.f32 %v271, %v250
    %v299 = vmul.f32 %v271, %v251
    %v300 = vmul.f32 %v271, %v252
    %v301 = vmul.f32 %v275, %v253
    %v302 = vmul.f32 %v275, %v254
    %v303 = vmul.f32 %v275, %v255
    %v304 = vmul.f32 %v275, %v256
    %v305 = vmul.f32 %v275, %v257
    %v306 = vmul.f32 %v275, %v258
    %v307 = vmul.f32 %v275, %v259
    %v308 = vmul.f32 %v275, %v260
    %v309 = vpack.c.bf16 %v278, %v277
    %v310 = vpack.c.bf16 %v280, %v279
    %v311 = vpack.c.bf16 %v282, %v281
    %v312 = vpack.c.bf16 %v284, %v283
    %v313 = vpack.c.bf16 %v286, %v285
    %v314 = vpack.c.bf16 %v288, %v287
    %v315 = vpack.c.bf16 %v290, %v289
    %v316 = vpack.c.bf16 %v292, %v291
    %v317 = vpack.c.bf16 %v294, %v293
    %v318 = vpack.c.bf16 %v296, %v295
    %v319 = vpack.c.bf16 %v298, %v297
    %v320 = vpack.c.bf16 %v300, %v299
    %v321 = vpack.c.bf16 %v302, %v301
    %v322 = vpack.c.bf16 %v304, %v303
    %v323 = vpack.c.bf16 %v306, %v305
    %v324 = vpack.c.bf16 %v308, %v307
    %v325 = vld [vmem:[#allocation8] sm:$0xf]
    %v326 = vld [vmem:[#allocation8 + $0x4] sm:$0xf]
    %v327 = vld [vmem:[#allocation8 + $0x8] sm:$0xf]
    %v328 = vld [vmem:[#allocation8 + $0xc] sm:$0xf]
    %v329 = vld [vmem:[#allocation8 + $0x10] sm:$0xf]
    %v330 = vld [vmem:[#allocation8 + $0x14] sm:$0xf]
    %v331 = vld [vmem:[#allocation8 + $0x18] sm:$0xf]
    %v332 = vld [vmem:[#allocation8 + $0x1c] sm:$0xf]
    %v333 = vld [vmem:[#allocation8 + $0x20] sm:$0xf]
    %v334 = vld [vmem:[#allocation8 + $0x24] sm:$0xf]
    %v335 = vld [vmem:[#allocation8 + $0x28] sm:$0xf]
    %v336 = vld [vmem:[#allocation8 + $0x2c] sm:$0xf]
    %v337 = vld [vmem:[#allocation8 + $0x30] sm:$0xf]
    %v338 = vld [vmem:[#allocation8 + $0x34] sm:$0xf]
    %v339 = vld [vmem:[#allocation8 + $0x38] sm:$0xf]
    %v340 = vld [vmem:[#allocation8 + $0x3c] sm:$0xf]
    %v357 = vunpack.c.l.b16 %v325
    %v358 = vunpack.c.l.b16 %v326
    %v359 = vunpack.c.l.b16 %v327
    %v360 = vunpack.c.l.b16 %v328
    %v361 = vunpack.c.l.b16 %v329
    %v362 = vunpack.c.l.b16 %v330
    %v363 = vunpack.c.l.b16 %v331
    %v364 = vunpack.c.l.b16 %v332
    %v365 = vunpack.c.l.b16 %v333
    %v366 = vunpack.c.l.b16 %v334
    %v367 = vunpack.c.l.b16 %v335
    %v368 = vunpack.c.l.b16 %v336
    %v369 = vunpack.c.l.b16 %v337
    %v370 = vunpack.c.l.b16 %v338
    %v371 = vunpack.c.l.b16 %v339
    %v372 = vunpack.c.l.b16 %v340
    %v373 = vpack.c.b16 %v358, %v357
    %v374 = vpack.c.b16 %v360, %v359
    %v375 = vpack.c.b16 %v362, %v361
    %v376 = vpack.c.b16 %v364, %v363
    %v377 = vpack.c.b16 %v366, %v365
    %v378 = vpack.c.b16 %v368, %v367
    %v379 = vpack.c.b16 %v370, %v369
    %v380 = vpack.c.b16 %v372, %v371
    %389 = vmatprep.subr.bf16.mxu0 0
    %390 = vmatpush1.bf16.msra.mxu0 %v380
    %391 = vmatprep.subr.bf16.mxu0 0
    %392 = vmatpush1.bf16.msra.mxu0 %v379
    %393 = vmatprep.subr.bf16.mxu0 0
    %394 = vmatpush1.bf16.msra.mxu0 %v378
    %395 = vmatprep.subr.bf16.mxu0 0
    %396 = vmatpush1.bf16.msra.mxu0 %v377
    %397 = vmatprep.subr.bf16.mxu0 0
    %398 = vmatpush1.bf16.msra.mxu0 %v376
    %399 = vmatprep.subr.bf16.mxu0 0
    %400 = vmatpush1.bf16.msra.mxu0 %v375
    %401 = vmatprep.subr.bf16.mxu0 0
    %402 = vmatpush1.bf16.msra.mxu0 %v374
    %403 = vmatprep.subr.bf16.mxu0 0
    %404 = vmatpush1.bf16.msra.mxu0 %v373
    %405 = vmatprep.subr.bf16.mxu0 0
    %406 = vmatpush2.bf16.msra.mxu0 0
    %407 = vmatprep.subr.bf16.mxu0 0
    %408 = vmatpush2.bf16.msra.mxu0 0
    %409 = vmatprep.subr.bf16.mxu0 0
    %410 = vmatpush2.bf16.msra.mxu0 0
    %411 = vmatprep.subr.bf16.mxu0 0
    %412 = vmatpush2.bf16.msra.mxu0 0
    %413 = vmatprep.subr.bf16.mxu0 0
    %414 = vmatpush2.bf16.msra.mxu0 0
    %415 = vmatprep.subr.bf16.mxu0 0
    %416 = vmatpush2.bf16.msra.mxu0 0
    %417 = vmatprep.subr.bf16.mxu0 0
    %418 = vmatpush2.bf16.msra.mxu0 0
    %419 = vmatprep.subr.bf16.mxu0 0
    %420 = vmatpush2.bf16.msra.mxu0 0
    %421 = vmatprep.mubr.bf16.mxu0 0
    %422 = vmatmul.mubr.bf16.gmra.mxu0 %v309
    %v423 = vpop.f32.mrf.mxu0
    %v424 = vadd.f32 0.0, %v423
    %v425 = vpop.f32.mrf.mxu0
    %v426 = vpop.f32.mrf.mxu0
    %v427 = vadd.f32 0.0, %v426
    %v428 = vpop.f32.mrf.mxu0
    %429 = vmatprep.mubr.bf16.mxu0 0
    %430 = vmatmul.mubr.bf16.gmra.mxu0 %v310
    %v431 = vpop.f32.mrf.mxu0
    %v432 = vadd.f32 0.0, %v431
    %v433 = vpop.f32.mrf.mxu0
    %v434 = vpop.f32.mrf.mxu0
    %v435 = vadd.f32 0.0, %v434
    %v436 = vpop.f32.mrf.mxu0
    %437 = vmatprep.mubr.bf16.mxu0 0
    %438 = vmatmul.mubr.bf16.gmra.mxu0 %v311
    %v439 = vpop.f32.mrf.mxu0
    %v440 = vadd.f32 0.0, %v439
    %v441 = vpop.f32.mrf.mxu0
    %v442 = vpop.f32.mrf.mxu0
    %v443 = vadd.f32 0.0, %v442
    %v444 = vpop.f32.mrf.mxu0
    %445 = vmatprep.mubr.bf16.mxu0 0
    %446 = vmatmul.mubr.bf16.gmra.mxu0 %v312
    %v447 = vpop.f32.mrf.mxu0
    %v448 = vadd.f32 0.0, %v447
    %v449 = vpop.f32.mrf.mxu0
    %v450 = vpop.f32.mrf.mxu0
    %v451 = vadd.f32 0.0, %v450
    %v452 = vpop.f32.mrf.mxu0
    %453 = vmatprep.mubr.bf16.mxu0 0
    %454 = vmatmul.mubr.bf16.gmra.mxu0 %v313
    %v455 = vpop.f32.mrf.mxu0
    %v456 = vadd.f32 0.0, %v455
    %v457 = vpop.f32.mrf.mxu0
    %v458 = vpop.f32.mrf.mxu0
    %v459 = vadd.f32 0.0, %v458
    %v460 = vpop.f32.mrf.mxu0
    %461 = vmatprep.mubr.bf16.mxu0 0
    %462 = vmatmul.mubr.bf16.gmra.mxu0 %v314
    %v463 = vpop.f32.mrf.mxu0
    %v464 = vadd.f32 0.0, %v463
    %v465 = vpop.f32.mrf.mxu0
    %v466 = vpop.f32.mrf.mxu0
    %v467 = vadd.f32 0.0, %v466
    %v468 = vpop.f32.mrf.mxu0
    %469 = vmatprep.mubr.bf16.mxu0 0
    %470 = vmatmul.mubr.bf16.gmra.mxu0 %v315
    %v471 = vpop.f32.mrf.mxu0
    %v472 = vadd.f32 0.0, %v471
    %v473 = vpop.f32.mrf.mxu0
    %v474 = vpop.f32.mrf.mxu0
    %v475 = vadd.f32 0.0, %v474
    %v476 = vpop.f32.mrf.mxu0
    %477 = vmatprep.mubr.bf16.mxu0 0
    %478 = vmatmul.mubr.bf16.gmra.mxu0 %v316
    %v479 = vpop.f32.mrf.mxu0
    %v480 = vadd.f32 0.0, %v479
    %v481 = vpop.f32.mrf.mxu0
    %v482 = vpop.f32.mrf.mxu0
    %v483 = vadd.f32 0.0, %v482
    %v484 = vpop.f32.mrf.mxu0
    %485 = vmatprep.mubr.bf16.mxu0 0
    %486 = vmatmul.mubr.bf16.gmra.mxu0 %v317
    %v487 = vpop.f32.mrf.mxu0
    %v488 = vadd.f32 0.0, %v487
    %v489 = vpop.f32.mrf.mxu0
    %v490 = vpop.f32.mrf.mxu0
    %v491 = vadd.f32 0.0, %v490
    %v492 = vpop.f32.mrf.mxu0
    %493 = vmatprep.mubr.bf16.mxu0 0
    %494 = vmatmul.mubr.bf16.gmra.mxu0 %v318
    %v495 = vpop.f32.mrf.mxu0
    %v496 = vadd.f32 0.0, %v495
    %v497 = vpop.f32.mrf.mxu0
    %v498 = vpop.f32.mrf.mxu0
    %v499 = vadd.f32 0.0, %v498
    %v500 = vpop.f32.mrf.mxu0
    %501 = vmatprep.mubr.bf16.mxu0 0
    %502 = vmatmul.mubr.bf16.gmra.mxu0 %v319
    %v503 = vpop.f32.mrf.mxu0
    %v504 = vadd.f32 0.0, %v503
    %v505 = vpop.f32.mrf.mxu0
    %v506 = vpop.f32.mrf.mxu0
    %v507 = vadd.f32 0.0, %v506
    %v508 = vpop.f32.mrf.mxu0
    %509 = vmatprep.mubr.bf16.mxu0 0
    %510 = vmatmul.mubr.bf16.gmra.mxu0 %v320
    %v511 = vpop.f32.mrf.mxu0
    %v512 = vadd.f32 0.0, %v511
    %v513 = vpop.f32.mrf.mxu0
    %v514 = vpop.f32.mrf.mxu0
    %v515 = vadd.f32 0.0, %v514
    %v516 = vpop.f32.mrf.mxu0
    %517 = vmatprep.mubr.bf16.mxu0 0
    %518 = vmatmul.mubr.bf16.gmra.mxu0 %v321
    %v519 = vpop.f32.mrf.mxu0
    %v520 = vadd.f32 0.0, %v519
    %v521 = vpop.f32.mrf.mxu0
    %v522 = vpop.f32.mrf.mxu0
    %v523 = vadd.f32 0.0, %v522
    %v524 = vpop.f32.mrf.mxu0
    %525 = vmatprep.mubr.bf16.mxu0 0
    %526 = vmatmul.mubr.bf16.gmra.mxu0 %v322
    %v527 = vpop.f32.mrf.mxu0
    %v528 = vadd.f32 0.0, %v527
    %v529 = vpop.f32.mrf.mxu0
    %v530 = vpop.f32.mrf.mxu0
    %v531 = vadd.f32 0.0, %v530
    %v532 = vpop.f32.mrf.mxu0
    %533 = vmatprep.mubr.bf16.mxu0 0
    %534 = vmatmul.mubr.bf16.gmra.mxu0 %v323
    %v535 = vpop.f32.mrf.mxu0
    %v536 = vadd.f32 0.0, %v535
    %v537 = vpop.f32.mrf.mxu0
    %v538 = vpop.f32.mrf.mxu0
    %v539 = vadd.f32 0.0, %v538
    %v540 = vpop.f32.mrf.mxu0
    %541 = vmatprep.mubr.bf16.mxu0 0
    %542 = vmatmul.mubr.bf16.gmra.mxu0 %v324
    %v543 = vpop.f32.mrf.mxu0
    %v544 = vadd.f32 0.0, %v543
    %v545 = vpop.f32.mrf.mxu0
    %v546 = vpop.f32.mrf.mxu0
    %v547 = vadd.f32 0.0, %v546
    %v548 = vpop.f32.mrf.mxu0
    %549 = vdwg.mxu0
    %v550 = vld [vmem:[%s4] sm:$0x1]
    %551 = vset.pattern.permute.xlu0 4
    %552 = vperm.xlu0 %551, %v157
    %v553 = vpop.permute.xlu0 %552
    %v555 = vlaneseq
    %v556 = vshrl.u32 %v555, 7
    %v557 = vsub.s32 0, %v556
    %v558 = vrot.slane %v553, %v557
    %559 = vset.pattern.permute.xlu0 4
    %560 = vperm.xlu0 %559, %v158
    %v561 = vpop.permute.xlu0 %560
    %v563 = vlaneseq
    %v564 = vshrl.u32 %v563, 7
    %v565 = vsub.s32 0, %v564
    %v566 = vrot.slane %v561, %v565
    %567 = vset.pattern.permute.xlu0 4
    %568 = vperm.xlu0 %567, %v159
    %v569 = vpop.permute.xlu0 %568
    %v571 = vlaneseq
    %v572 = vshrl.u32 %v571, 7
    %v573 = vsub.s32 0, %v572
    %v574 = vrot.slane %v569, %v573
    %575 = vset.pattern.permute.xlu0 4
    %576 = vperm.xlu0 %575, %v160
    %v577 = vpop.permute.xlu0 %576
    %v579 = vlaneseq
    %v580 = vshrl.u32 %v579, 7
    %v581 = vsub.s32 0, %v580
    %v582 = vrot.slane %v577, %v581
    %v583 = vmul.f32 %v558, %v550
    %v584 = vmul.f32 %v566, %v550
    %v585 = vmul.f32 %v574, %v550
    %v586 = vmul.f32 %v582, %v550
    %v591 = vlaneseq
    %v592 = vshrl.u32 %v591, 7
    %v593 = vsub.s32 0, %v592
    %v594 = vrot.slane %v583, %v593
    %v595 = vlaneseq
    %v596 = vshrl.u32 %v595, 7
    %v597 = vsub.s32 0, %v596
    %v598 = vrot.slane %v584, %v597
    %v599 = vlaneseq
    %v600 = vshrl.u32 %v599, 7
    %v601 = vsub.s32 0, %v600
    %v602 = vrot.slane %v585, %v601
    %v603 = vlaneseq
    %v604 = vshrl.u32 %v603, 7
    %v605 = vsub.s32 0, %v604
    %v606 = vrot.slane %v586, %v605
    %v611 = vadd.f32 %v424, %v594
    %v612 = vadd.f32 %v427, %v594
    %v613 = vadd.f32 %v432, %v594
    %v614 = vadd.f32 %v435, %v594
    %v615 = vadd.f32 %v440, %v594
    %v616 = vadd.f32 %v443, %v594
    %v617 = vadd.f32 %v448, %v594
    %v618 = vadd.f32 %v451, %v594
    %v619 = vadd.f32 %v456, %v598
    %v620 = vadd.f32 %v459, %v598
    %v621 = vadd.f32 %v464, %v598
    %v622 = vadd.f32 %v467, %v598
    %v623 = vadd.f32 %v472, %v598
    %v624 = vadd.f32 %v475, %v598
    %v625 = vadd.f32 %v480, %v598
    %v626 = vadd.f32 %v483, %v598
    %v627 = vadd.f32 %v488, %v602
    %v628 = vadd.f32 %v491, %v602
    %v629 = vadd.f32 %v496, %v602
    %v630 = vadd.f32 %v499, %v602
    %v631 = vadd.f32 %v504, %v602
    %v632 = vadd.f32 %v507, %v602
    %v633 = vadd.f32 %v512, %v602
    %v634 = vadd.f32 %v515, %v602
    %v635 = vadd.f32 %v520, %v606
    %v636 = vadd.f32 %v523, %v606
    %v637 = vadd.f32 %v528, %v606
    %v638 = vadd.f32 %v531, %v606
    %v639 = vadd.f32 %v536, %v606
    %v640 = vadd.f32 %v539, %v606
    %v641 = vadd.f32 %v544, %v606
    %v642 = vadd.f32 %v547, %v606
    %v643 = vtanh.pop %v611
    %v644 = vtanh.pop %v612
    %v645 = vtanh.pop %v613
    %v646 = vtanh.pop %v614
    %v647 = vtanh.pop %v615
    %v648 = vtanh.pop %v616
    %v649 = vtanh.pop %v617
    %v650 = vtanh.pop %v618
    %v651 = vtanh.pop %v619
    %v652 = vtanh.pop %v620
    %v653 = vtanh.pop %v621
    %v654 = vtanh.pop %v622
    %v655 = vtanh.pop %v623
    %v656 = vtanh.pop %v624
    %v657 = vtanh.pop %v625
    %v658 = vtanh.pop %v626
    %v659 = vtanh.pop %v627
    %v660 = vtanh.pop %v628
    %v661 = vtanh.pop %v629
    %v662 = vtanh.pop %v630
    %v663 = vtanh.pop %v631
    %v664 = vtanh.pop %v632
    %v665 = vtanh.pop %v633
    %v666 = vtanh.pop %v634
    %v667 = vtanh.pop %v635
    %v668 = vtanh.pop %v636
    %v669 = vtanh.pop %v637
    %v670 = vtanh.pop %v638
    %v671 = vtanh.pop %v639
    %v672 = vtanh.pop %v640
    %v673 = vtanh.pop %v641
    %v674 = vtanh.pop %v642
    %v675 = vpack.c.bf16 %v644, %v643
    %v676 = vpack.c.bf16 %v646, %v645
    %v677 = vpack.c.bf16 %v648, %v647
    %v678 = vpack.c.bf16 %v650, %v649
    %v679 = vpack.c.bf16 %v652, %v651
    %v680 = vpack.c.bf16 %v654, %v653
    %v681 = vpack.c.bf16 %v656, %v655
    %v682 = vpack.c.bf16 %v658, %v657
    %v683 = vpack.c.bf16 %v660, %v659
    %v684 = vpack.c.bf16 %v662, %v661
    %v685 = vpack.c.bf16 %v664, %v663
    %v686 = vpack.c.bf16 %v666, %v665
    %v687 = vpack.c.bf16 %v668, %v667
    %v688 = vpack.c.bf16 %v670, %v669
    %v689 = vpack.c.bf16 %v672, %v671
    %v690 = vpack.c.bf16 %v674, %v673
    %v691 = vld [vmem:[#allocation10] sm:$0xf]
    %v692 = vld [vmem:[#allocation10 + $0x4] sm:$0xf]
    %v693 = vld [vmem:[#allocation10 + $0x8] sm:$0xf]
    %v694 = vld [vmem:[#allocation10 + $0xc] sm:$0xf]
    %v695 = vld [vmem:[#allocation10 + $0x10] sm:$0xf]
    %v696 = vld [vmem:[#allocation10 + $0x14] sm:$0xf]
    %v697 = vld [vmem:[#allocation10 + $0x18] sm:$0xf]
    %v698 = vld [vmem:[#allocation10 + $0x1c] sm:$0xf]
    %v699 = vld [vmem:[#allocation10 + $0x20] sm:$0xf]
    %v700 = vld [vmem:[#allocation10 + $0x24] sm:$0xf]
    %v701 = vld [vmem:[#allocation10 + $0x28] sm:$0xf]
    %v702 = vld [vmem:[#allocation10 + $0x2c] sm:$0xf]
    %v703 = vld [vmem:[#allocation10 + $0x30] sm:$0xf]
    %v704 = vld [vmem:[#allocation10 + $0x34] sm:$0xf]
    %v705 = vld [vmem:[#allocation10 + $0x38] sm:$0xf]
    %v706 = vld [vmem:[#allocation10 + $0x3c] sm:$0xf]
    %v723 = vunpack.c.l.b16 %v691
    %v724 = vunpack.c.l.b16 %v692
    %v725 = vunpack.c.l.b16 %v693
    %v726 = vunpack.c.l.b16 %v694
    %v727 = vunpack.c.l.b16 %v695
    %v728 = vunpack.c.l.b16 %v696
    %v729 = vunpack.c.l.b16 %v697
    %v730 = vunpack.c.l.b16 %v698
    %v731 = vunpack.c.l.b16 %v699
    %v732 = vunpack.c.l.b16 %v700
    %v733 = vunpack.c.l.b16 %v701
    %v734 = vunpack.c.l.b16 %v702
    %v735 = vunpack.c.l.b16 %v703
    %v736 = vunpack.c.l.b16 %v704
    %v737 = vunpack.c.l.b16 %v705
    %v738 = vunpack.c.l.b16 %v706
    %v739 = vpack.c.b16 %v724, %v723
    %v740 = vpack.c.b16 %v726, %v725
    %v741 = vpack.c.b16 %v728, %v727
    %v742 = vpack.c.b16 %v730, %v729
    %v743 = vpack.c.b16 %v732, %v731
    %v744 = vpack.c.b16 %v734, %v733
    %v745 = vpack.c.b16 %v736, %v735
    %v746 = vpack.c.b16 %v738, %v737
    %755 = vmatprep.subr.bf16.mxu0 0
    %756 = vmatpush1.bf16.msra.mxu0 %v746
    %757 = vmatprep.subr.bf16.mxu0 0
    %758 = vmatpush1.bf16.msra.mxu0 %v745
    %759 = vmatprep.subr.bf16.mxu0 0
    %760 = vmatpush1.bf16.msra.mxu0 %v744
    %761 = vmatprep.subr.bf16.mxu0 0
    %762 = vmatpush1.bf16.msra.mxu0 %v743
    %763 = vmatprep.subr.bf16.mxu0 0
    %764 = vmatpush1.bf16.msra.mxu0 %v742
    %765 = vmatprep.subr.bf16.mxu0 0
    %766 = vmatpush1.bf16.msra.mxu0 %v741
    %767 = vmatprep.subr.bf16.mxu0 0
    %768 = vmatpush1.bf16.msra.mxu0 %v740
    %769 = vmatprep.subr.bf16.mxu0 0
    %770 = vmatpush1.bf16.msra.mxu0 %v739
    %771 = vmatprep.subr.bf16.mxu0 0
    %772 = vmatpush2.bf16.msra.mxu0 0
    %773 = vmatprep.subr.bf16.mxu0 0
    %774 = vmatpush2.bf16.msra.mxu0 0
    %775 = vmatprep.subr.bf16.mxu0 0
    %776 = vmatpush2.bf16.msra.mxu0 0
    %777 = vmatprep.subr.bf16.mxu0 0
    %778 = vmatpush2.bf16.msra.mxu0 0
    %779 = vmatprep.subr.bf16.mxu0 0
    %780 = vmatpush2.bf16.msra.mxu0 0
    %781 = vmatprep.subr.bf16.mxu0 0
    %782 = vmatpush2.bf16.msra.mxu0 0
    %783 = vmatprep.subr.bf16.mxu0 0
    %784 = vmatpush2.bf16.msra.mxu0 0
    %785 = vmatprep.subr.bf16.mxu0 0
    %786 = vmatpush2.bf16.msra.mxu0 0
    %787 = vmatprep.mubr.bf16.mxu0 0
    %788 = vmatmul.mubr.bf16.gmra.mxu0 %v675
    %v789 = vpop.f32.mrf.mxu0
    %v790 = vadd.f32 0.0, %v789
    %v791 = vpop.f32.mrf.mxu0
    %v792 = vpop.f32.mrf.mxu0
    %v793 = vadd.f32 0.0, %v792
    %v794 = vpop.f32.mrf.mxu0
    %795 = vmatprep.mubr.bf16.mxu0 0
    %796 = vmatmul.mubr.bf16.gmra.mxu0 %v676
    %v797 = vpop.f32.mrf.mxu0
    %v798 = vadd.f32 0.0, %v797
    %v799 = vpop.f32.mrf.mxu0
    %v800 = vpop.f32.mrf.mxu0
    %v801 = vadd.f32 0.0, %v800
    %v802 = vpop.f32.mrf.mxu0
    %803 = vmatprep.mubr.bf16.mxu0 0
    %804 = vmatmul.mubr.bf16.gmra.mxu0 %v677
    %v805 = vpop.f32.mrf.mxu0
    %v806 = vadd.f32 0.0, %v805
    %v807 = vpop.f32.mrf.mxu0
    %v808 = vpop.f32.mrf.mxu0
    %v809 = vadd.f32 0.0, %v808
    %v810 = vpop.f32.mrf.mxu0
    %811 = vmatprep.mubr.bf16.mxu0 0
    %812 = vmatmul.mubr.bf16.gmra.mxu0 %v678
    %v813 = vpop.f32.mrf.mxu0
    %v814 = vadd.f32 0.0, %v813
    %v815 = vpop.f32.mrf.mxu0
    %v816 = vpop.f32.mrf.mxu0
    %v817 = vadd.f32 0.0, %v816
    %v818 = vpop.f32.mrf.mxu0
    %819 = vmatprep.mubr.bf16.mxu0 0
    %820 = vmatmul.mubr.bf16.gmra.mxu0 %v679
    %v821 = vpop.f32.mrf.mxu0
    %v822 = vadd.f32 0.0, %v821
    %v823 = vpop.f32.mrf.mxu0
    %v824 = vpop.f32.mrf.mxu0
    %v825 = vadd.f32 0.0, %v824
    %v826 = vpop.f32.mrf.mxu0
    %827 = vmatprep.mubr.bf16.mxu0 0
    %828 = vmatmul.mubr.bf16.gmra.mxu0 %v680
    %v829 = vpop.f32.mrf.mxu0
    %v830 = vadd.f32 0.0, %v829
    %v831 = vpop.f32.mrf.mxu0
    %v832 = vpop.f32.mrf.mxu0
    %v833 = vadd.f32 0.0, %v832
    %v834 = vpop.f32.mrf.mxu0
    %835 = vmatprep.mubr.bf16.mxu0 0
    %836 = vmatmul.mubr.bf16.gmra.mxu0 %v681
    %v837 = vpop.f32.mrf.mxu0
    %v838 = vadd.f32 0.0, %v837
    %v839 = vpop.f32.mrf.mxu0
    %v840 = vpop.f32.mrf.mxu0
    %v841 = vadd.f32 0.0, %v840
    %v842 = vpop.f32.mrf.mxu0
    %843 = vmatprep.mubr.bf16.mxu0 0
    %844 = vmatmul.mubr.bf16.gmra.mxu0 %v682
    %v845 = vpop.f32.mrf.mxu0
    %v846 = vadd.f32 0.0, %v845
    %v847 = vpop.f32.mrf.mxu0
    %v848 = vpop.f32.mrf.mxu0
    %v849 = vadd.f32 0.0, %v848
    %v850 = vpop.f32.mrf.mxu0
    %851 = vmatprep.mubr.bf16.mxu0 0
    %852 = vmatmul.mubr.bf16.gmra.mxu0 %v683
    %v853 = vpop.f32.mrf.mxu0
    %v854 = vadd.f32 0.0, %v853
    %v855 = vpop.f32.mrf.mxu0
    %v856 = vpop.f32.mrf.mxu0
    %v857 = vadd.f32 0.0, %v856
    %v858 = vpop.f32.mrf.mxu0
    %859 = vmatprep.mubr.bf16.mxu0 0
    %860 = vmatmul.mubr.bf16.gmra.mxu0 %v684
    %v861 = vpop.f32.mrf.mxu0
    %v862 = vadd.f32 0.0, %v861
    %v863 = vpop.f32.mrf.mxu0
    %v864 = vpop.f32.mrf.mxu0
    %v865 = vadd.f32 0.0, %v864
    %v866 = vpop.f32.mrf.mxu0
    %867 = vmatprep.mubr.bf16.mxu0 0
    %868 = vmatmul.mubr.bf16.gmra.mxu0 %v685
    %v869 = vpop.f32.mrf.mxu0
    %v870 = vadd.f32 0.0, %v869
    %v871 = vpop.f32.mrf.mxu0
    %v872 = vpop.f32.mrf.mxu0
    %v873 = vadd.f32 0.0, %v872
    %v874 = vpop.f32.mrf.mxu0
    %875 = vmatprep.mubr.bf16.mxu0 0
    %876 = vmatmul.mubr.bf16.gmra.mxu0 %v686
    %v877 = vpop.f32.mrf.mxu0
    %v878 = vadd.f32 0.0, %v877
    %v879 = vpop.f32.mrf.mxu0
    %v880 = vpop.f32.mrf.mxu0
    %v881 = vadd.f32 0.0, %v880
    %v882 = vpop.f32.mrf.mxu0
    %883 = vmatprep.mubr.bf16.mxu0 0
    %884 = vmatmul.mubr.bf16.gmra.mxu0 %v687
    %v885 = vpop.f32.mrf.mxu0
    %v886 = vadd.f32 0.0, %v885
    %v887 = vpop.f32.mrf.mxu0
    %v888 = vpop.f32.mrf.mxu0
    %v889 = vadd.f32 0.0, %v888
    %v890 = vpop.f32.mrf.mxu0
    %891 = vmatprep.mubr.bf16.mxu0 0
    %892 = vmatmul.mubr.bf16.gmra.mxu0 %v688
    %v893 = vpop.f32.mrf.mxu0
    %v894 = vadd.f32 0.0, %v893
    %v895 = vpop.f32.mrf.mxu0
    %v896 = vpop.f32.mrf.mxu0
    %v897 = vadd.f32 0.0, %v896
    %v898 = vpop.f32.mrf.mxu0
    %899 = vmatprep.mubr.bf16.mxu0 0
    %900 = vmatmul.mubr.bf16.gmra.mxu0 %v689
    %v901 = vpop.f32.mrf.mxu0
    %v902 = vadd.f32 0.0, %v901
    %v903 = vpop.f32.mrf.mxu0
    %v904 = vpop.f32.mrf.mxu0
    %v905 = vadd.f32 0.0, %v904
    %v906 = vpop.f32.mrf.mxu0
    %907 = vmatprep.mubr.bf16.mxu0 0
    %908 = vmatmul.mubr.bf16.gmra.mxu0 %v690
    %v909 = vpop.f32.mrf.mxu0
    %v910 = vadd.f32 0.0, %v909
    %v911 = vpop.f32.mrf.mxu0
    %v912 = vpop.f32.mrf.mxu0
    %v913 = vadd.f32 0.0, %v912
    %v914 = vpop.f32.mrf.mxu0
    %915 = vdwg.mxu0
    %916 = vset.pattern.permute.xlu0 1
    %917 = vperm.xlu0 %916, %v168
    %v918 = vpop.permute.xlu0 %917
    %920 = vset.pattern.permute.xlu0 1
    %921 = vperm.xlu0 %920, %v172
    %v922 = vpop.permute.xlu0 %921
    %924 = vset.pattern.permute.xlu0 1
    %925 = vperm.xlu0 %924, %v176
    %v926 = vpop.permute.xlu0 %925
    %928 = vset.pattern.permute.xlu0 1
    %929 = vperm.xlu0 %928, %v180
    %v930 = vpop.permute.xlu0 %929
    %v932 = vmul.f32 %v918, %v229
    %v933 = vmul.f32 %v918, %v230
    %v934 = vmul.f32 %v918, %v231
    %v935 = vmul.f32 %v918, %v232
    %v936 = vmul.f32 %v918, %v233
    %v937 = vmul.f32 %v918, %v234
    %v938 = vmul.f32 %v918, %v235
    %v939 = vmul.f32 %v918, %v236
    %v940 = vmul.f32 %v922, %v237
    %v941 = vmul.f32 %v922, %v238
    %v942 = vmul.f32 %v922, %v239
    %v943 = vmul.f32 %v922, %v240
    %v944 = vmul.f32 %v922, %v241
    %v945 = vmul.f32 %v922, %v242
    %v946 = vmul.f32 %v922, %v243
    %v947 = vmul.f32 %v922, %v244
    %v948 = vmul.f32 %v926, %v245
    %v949 = vmul.f32 %v926, %v246
    %v950 = vmul.f32 %v926, %v247
    %v951 = vmul.f32 %v926, %v248
    %v952 = vmul.f32 %v926, %v249
    %v953 = vmul.f32 %v926, %v250
    %v954 = vmul.f32 %v926, %v251
    %v955 = vmul.f32 %v926, %v252
    %v956 = vmul.f32 %v930, %v253
    %v957 = vmul.f32 %v930, %v254
    %v958 = vmul.f32 %v930, %v255
    %v959 = vmul.f32 %v930, %v256
    %v960 = vmul.f32 %v930, %v257
    %v961 = vmul.f32 %v930, %v258
    %v962 = vmul.f32 %v930, %v259
    %v963 = vmul.f32 %v930, %v260
    %v964 = vsub.f32 %v93, %v932
    %v965 = vsub.f32 %v94, %v933
    %v966 = vsub.f32 %v95, %v934
    %v967 = vsub.f32 %v96, %v935
    %v968 = vsub.f32 %v97, %v936
    %v969 = vsub.f32 %v98, %v937
    %v970 = vsub.f32 %v99, %v938
    %v971 = vsub.f32 %v100, %v939
    %v972 = vsub.f32 %v101, %v940
    %v973 = vsub.f32 %v102, %v941
    %v974 = vsub.f32 %v103, %v942
    %v975 = vsub.f32 %v104, %v943
    %v976 = vsub.f32 %v105, %v944
    %v977 = vsub.f32 %v106, %v945
    %v978 = vsub.f32 %v107, %v946
    %v979 = vsub.f32 %v108, %v947
    %v980 = vsub.f32 %v109, %v948
    %v981 = vsub.f32 %v110, %v949
    %v982 = vsub.f32 %v111, %v950
    %v983 = vsub.f32 %v112, %v951
    %v984 = vsub.f32 %v113, %v952
    %v985 = vsub.f32 %v114, %v953
    %v986 = vsub.f32 %v115, %v954
    %v987 = vsub.f32 %v116, %v955
    %v988 = vsub.f32 %v117, %v956
    %v989 = vsub.f32 %v118, %v957
    %v990 = vsub.f32 %v119, %v958
    %v991 = vsub.f32 %v120, %v959
    %v992 = vsub.f32 %v121, %v960
    %v993 = vsub.f32 %v122, %v961
    %v994 = vsub.f32 %v123, %v962
    %v995 = vsub.f32 %v124, %v963
    %996 = vset.pattern.permute.xlu0 3
    %997 = vperm.xlu0 %996, %v168
    %v998 = vpop.permute.xlu0 %997
    %1000 = vset.pattern.permute.xlu0 3
    %1001 = vperm.xlu0 %1000, %v172
    %v1002 = vpop.permute.xlu0 %1001
    %1004 = vset.pattern.permute.xlu0 3
    %1005 = vperm.xlu0 %1004, %v176
    %v1006 = vpop.permute.xlu0 %1005
    %1008 = vset.pattern.permute.xlu0 3
    %1009 = vperm.xlu0 %1008, %v180
    %v1010 = vpop.permute.xlu0 %1009
    %v1012 = vmul.f32 %v964, %v998
    %v1013 = vmul.f32 %v965, %v998
    %v1014 = vmul.f32 %v966, %v998
    %v1015 = vmul.f32 %v967, %v998
    %v1016 = vmul.f32 %v968, %v998
    %v1017 = vmul.f32 %v969, %v998
    %v1018 = vmul.f32 %v970, %v998
    %v1019 = vmul.f32 %v971, %v998
    %v1020 = vmul.f32 %v972, %v1002
    %v1021 = vmul.f32 %v973, %v1002
    %v1022 = vmul.f32 %v974, %v1002
    %v1023 = vmul.f32 %v975, %v1002
    %v1024 = vmul.f32 %v976, %v1002
    %v1025 = vmul.f32 %v977, %v1002
    %v1026 = vmul.f32 %v978, %v1002
    %v1027 = vmul.f32 %v979, %v1002
    %v1028 = vmul.f32 %v980, %v1006
    %v1029 = vmul.f32 %v981, %v1006
    %v1030 = vmul.f32 %v982, %v1006
    %v1031 = vmul.f32 %v983, %v1006
    %v1032 = vmul.f32 %v984, %v1006
    %v1033 = vmul.f32 %v985, %v1006
    %v1034 = vmul.f32 %v986, %v1006
    %v1035 = vmul.f32 %v987, %v1006
    %v1036 = vmul.f32 %v988, %v1010
    %v1037 = vmul.f32 %v989, %v1010
    %v1038 = vmul.f32 %v990, %v1010
    %v1039 = vmul.f32 %v991, %v1010
    %v1040 = vmul.f32 %v992, %v1010
    %v1041 = vmul.f32 %v993, %v1010
    %v1042 = vmul.f32 %v994, %v1010
    %v1043 = vmul.f32 %v995, %v1010
    %v1044 = vsub.f32 %v790, %v1012
    %v1045 = vsub.f32 %v793, %v1013
    %v1046 = vsub.f32 %v798, %v1014
    %v1047 = vsub.f32 %v801, %v1015
    %v1048 = vsub.f32 %v806, %v1016
    %v1049 = vsub.f32 %v809, %v1017
    %v1050 = vsub.f32 %v814, %v1018
    %v1051 = vsub.f32 %v817, %v1019
    %v1052 = vsub.f32 %v822, %v1020
    %v1053 = vsub.f32 %v825, %v1021
    %v1054 = vsub.f32 %v830, %v1022
    %v1055 = vsub.f32 %v833, %v1023
    %v1056 = vsub.f32 %v838, %v1024
    %v1057 = vsub.f32 %v841, %v1025
    %v1058 = vsub.f32 %v846, %v1026
    %v1059 = vsub.f32 %v849, %v1027
    %v1060 = vsub.f32 %v854, %v1028
    %v1061 = vsub.f32 %v857, %v1029
    %v1062 = vsub.f32 %v862, %v1030
    %v1063 = vsub.f32 %v865, %v1031
    %v1064 = vsub.f32 %v870, %v1032
    %v1065 = vsub.f32 %v873, %v1033
    %v1066 = vsub.f32 %v878, %v1034
    %v1067 = vsub.f32 %v881, %v1035
    %v1068 = vsub.f32 %v886, %v1036
    %v1069 = vsub.f32 %v889, %v1037
    %v1070 = vsub.f32 %v894, %v1038
    %v1071 = vsub.f32 %v897, %v1039
    %v1072 = vsub.f32 %v902, %v1040
    %v1073 = vsub.f32 %v905, %v1041
    %v1074 = vsub.f32 %v910, %v1042
    %v1075 = vsub.f32 %v913, %v1043
    %v1076 = vmul.f32 %v1044, %v1044
    %v1077 = vmul.f32 %v1045, %v1045
    %v1078 = vmul.f32 %v1046, %v1046
    %v1079 = vmul.f32 %v1047, %v1047
    %v1080 = vmul.f32 %v1048, %v1048
    %v1081 = vmul.f32 %v1049, %v1049
    %v1082 = vmul.f32 %v1050, %v1050
    %v1083 = vmul.f32 %v1051, %v1051
    %v1084 = vmul.f32 %v1052, %v1052
    %v1085 = vmul.f32 %v1053, %v1053
    %v1086 = vmul.f32 %v1054, %v1054
    %v1087 = vmul.f32 %v1055, %v1055
    %v1088 = vmul.f32 %v1056, %v1056
    %v1089 = vmul.f32 %v1057, %v1057
    %v1090 = vmul.f32 %v1058, %v1058
    %v1091 = vmul.f32 %v1059, %v1059
    %v1092 = vmul.f32 %v1060, %v1060
    %v1093 = vmul.f32 %v1061, %v1061
    %v1094 = vmul.f32 %v1062, %v1062
    %v1095 = vmul.f32 %v1063, %v1063
    %v1096 = vmul.f32 %v1064, %v1064
    %v1097 = vmul.f32 %v1065, %v1065
    %v1098 = vmul.f32 %v1066, %v1066
    %v1099 = vmul.f32 %v1067, %v1067
    %v1100 = vmul.f32 %v1068, %v1068
    %v1101 = vmul.f32 %v1069, %v1069
    %v1102 = vmul.f32 %v1070, %v1070
    %v1103 = vmul.f32 %v1071, %v1071
    %v1104 = vmul.f32 %v1072, %v1072
    %v1105 = vmul.f32 %v1073, %v1073
    %v1106 = vmul.f32 %v1074, %v1074
    %v1107 = vmul.f32 %v1075, %v1075
    %v1108 = vadd.f32 %v1076, %v1077
    %v1109 = vadd.f32 %v1108, %v1078
    %v1110 = vadd.f32 %v1109, %v1079
    %v1111 = vadd.f32 %v1110, %v1080
    %v1112 = vadd.f32 %v1111, %v1081
    %v1113 = vadd.f32 %v1112, %v1082
    %v1114 = vadd.f32 %v1113, %v1083
    %v1115 = vadd.f32 %v1114, %v1084
    %v1116 = vadd.f32 %v1115, %v1085
    %v1117 = vadd.f32 %v1116, %v1086
    %v1118 = vadd.f32 %v1117, %v1087
    %v1119 = vadd.f32 %v1118, %v1088
    %v1120 = vadd.f32 %v1119, %v1089
    %v1121 = vadd.f32 %v1120, %v1090
    %v1122 = vadd.f32 %v1121, %v1091
    %v1123 = vadd.f32 %v1122, %v1092
    %v1124 = vadd.f32 %v1123, %v1093
    %v1125 = vadd.f32 %v1124, %v1094
    %v1126 = vadd.f32 %v1125, %v1095
    %v1127 = vadd.f32 %v1126, %v1096
    %v1128 = vadd.f32 %v1127, %v1097
    %v1129 = vadd.f32 %v1128, %v1098
    %v1130 = vadd.f32 %v1129, %v1099
    %v1131 = vadd.f32 %v1130, %v1100
    %v1132 = vadd.f32 %v1131, %v1101
    %v1133 = vadd.f32 %v1132, %v1102
    %v1134 = vadd.f32 %v1133, %v1103
    %v1135 = vadd.f32 %v1134, %v1104
    %v1136 = vadd.f32 %v1135, %v1105
    %v1137 = vadd.f32 %v1136, %v1106
    %v1138 = vadd.f32 %v1137, %v1107
    %1139 = vadd.xlane.f32.xlu0 %v1138
    %v1140 = vpop.xlane.xlu0 %1139
    %v1141 = vrot.slane %v1140, 4
    %v1142 = vadd.f32 %v1140, %v1141
    %v1143 = vrot.slane %v1142, 2
    %v1144 = vadd.f32 %v1142, %v1143
    %v1145 = vrot.slane %v1144, 1
    %v1146 = vadd.f32 %v1144, %v1145
    %s1147 = vtos %v1146
    %v1148 = vstv %s1147
    %vm1149 = vcmask 0
    %1150 = vst.msk [vmem:[#allocation11] sm:$0x1] %vm1149, %v1148
    // Predicated region
    $region46: #{tpu_custom_call.1} parent=1 // pred_check
      _
    $region47: #{tpu_custom_call.1} parent=1 // pred_check_branch
      %1152 = sbr.rel (0) target = $region49
    $region48: #{tpu_custom_call.1} parent=1 // pred_region
      %s1154 = ssub.s32 16, 16
      %1155 = vsyncadd [#allocation4], %s1154
      %s1157 = sshll.u32 [#allocation11], 4
      %s1158 = int_to_ptr.vmem [resolvable:$true] %s1157
      %1160 = dma.vmem_to_hbm [thread:$0]  %s1158, 16, %s6, [#allocation4]
    $region49: #{tpu_custom_call.1} parent=1 // pred_fallthru
      _
    // Predicated region
    $region50: #{tpu_custom_call.1} parent=1 // pred_check
      _
    $region51: #{tpu_custom_call.1} parent=1 // pred_check_branch
      %1162 = sbr.rel (0) target = $region53
    $region52: #{tpu_custom_call.1} parent=1 // pred_region
      %1163 = dma.done [#allocation4], 16
    $region53: #{tpu_custom_call.1} parent=1 // pred_fallthru
      _
    %1164 = vsyncpa [#allocation3], 1
    %1165 = vsyncpa [#allocation6], 1
    %1166 = vsyncpa [#allocation9], 1
    %1167 = vsyncpa [#allocation4], 1

</llo_original>
